<compile_context>
chip_gen: v7x
topology: tpu7x:2x2x1
jax: 0.10.0
libtpu: 0.0.40
codegen_flags: <defaults>
</compile_context>

<pallas_src>
import jax
import jax.numpy as jnp
from jax.experimental import pallas as pl
from jax.experimental.pallas import tpu as pltpu

LANE = 128          # padded width for every layer output (64, 32, num_classes -> 128)
NEG_BIG = -1e30     # bias for padded class columns -> exp(logit) == 0


def fnn_kernel(x_ref, w1_ref, b1_ref, w2_ref, b2_ref, w3_ref, b3_ref, out_ref):
    # Cast the f32 x stream to bf16 on-chip (saves a separate HBM cast pass).
    x = x_ref[...].astype(jnp.bfloat16)                                  # (TB, 784)

    # Layer 1: Linear(784 -> 64 [pad 128]) + tanh.  bf16 MXU operands, f32 accumulate.
    h1 = jnp.dot(x, w1_ref[...], preferred_element_type=jnp.float32) + b1_ref[...]
    h1 = jnp.tanh(h1)                                                    # padded cols stay 0

    # Layer 2: Linear(64 -> 32 [pad 128]) + relu.
    h2 = jnp.dot(h1.astype(jnp.bfloat16), w2_ref[...],
                 preferred_element_type=jnp.float32) + b2_ref[...]
    h2 = jnp.maximum(h2, 0.0)                                            # padded cols stay 0

    # Layer 3: Linear(32 -> num_classes [pad 128]) + row softmax.
    logits = jnp.dot(h2.astype(jnp.bfloat16), w3_ref[...],
                     preferred_element_type=jnp.float32) + b3_ref[...]
    m = jnp.max(logits, axis=-1, keepdims=True)                          # real classes dominate
    e = jnp.exp(logits - m)                                              # padded classes -> exp(-1e30) == 0
    denom = jnp.sum(e, axis=-1, keepdims=True)
    out_ref[...] = (e / denom).astype(out_ref.dtype)                     # exact divide; hidden under DMA


def _round_up(n, m):
    return ((n + m - 1) // m) * m


def fnn_forward(x, params, num_classes, *, tb=2048):
    """x: (B, 1, 28, 28) or (B, 784) float32.  Returns (B, num_classes) f32 softmax probs."""
    B = x.shape[0]
    x2d = x.reshape(B, -1)                      # == x.view(B, -1); stays f32 (cast is in-kernel)
    assert x2d.shape[1] == 784
    w1, b1, w2, b2, w3, b3 = params
    PN = w3.shape[1]                            # padded class dim (128) -> lane-dense stores

    # Batch tiling: >= 2 tiles whenever possible so v7x's two TensorCores both get work;
    # ragged last tile handled by Pallas partial edge blocks (no jnp.pad HBM pass).
    if B <= 16:
        TB = B                                  # single tiny tile (block == full dim is legal)
    elif B <= tb:
        TB = _round_up((B + 1) // 2, 16)        # split into two tiles for megacore
    else:
        TB = tb
    grid = (int(pl.cdiv(B, TB)),)

    # Same block every step -> stays VMEM-resident, no re-issued weight DMAs.
    resident = lambda arr: pl.BlockSpec(arr.shape, lambda i: (0, 0))

    weight_bytes = sum(int(p.size) * p.dtype.itemsize for p in params)
    cost = pl.CostEstimate(
        flops=2 * B * (784 + LANE + LANE) * LANE,
        transcendentals=2 * B * LANE,                       # tanh + exp, 128 lanes per row
        bytes_accessed=B * 784 * 4 + B * PN * 2 + weight_bytes,
    )

    out = pl.pallas_call(
        fnn_kernel,
        out_shape=jax.ShapeDtypeStruct((B, PN), jnp.bfloat16),   # bf16, lane-dense writeback
        grid=grid,
        in_specs=[
            pl.BlockSpec((TB, 784), lambda i: (i, 0)),           # streamed, double-buffered f32 x
            resident(w1), resident(b1),
            resident(w2), resident(b2),
            resident(w3), resident(b3),
        ],
        out_specs=pl.BlockSpec((TB, PN), lambda i: (i, 0)),
        compiler_params=pltpu.CompilerParams(
            dimension_semantics=("parallel",),    # shard batch tiles across v7x's 2 TCs
            vmem_limit_bytes=32 * 1024 * 1024,    # headroom; TB=2048 tile set is ~14 MB
        ),
        cost_estimate=cost,
    )(x2d, w1, b1, w2, b2, w3, b3)

    return out[:, :num_classes].astype(jnp.float32)   # drop padded class columns, back to f32


def fnn_reference(x, params, num_classes):
    """Plain-JAX reference using the identical bf16-operand / f32-accumulate math."""
    B = x.shape[0]
    x2d = x.reshape(B, -1).astype(jnp.bfloat16)
    w1, b1, w2, b2, w3, b3 = params
    h1 = jnp.tanh(jnp.dot(x2d, w1, preferred_element_type=jnp.float32) + b1)
    h2 = jnp.maximum(jnp.dot(h1.astype(jnp.bfloat16), w2,
                             preferred_element_type=jnp.float32) + b2, 0.0)
    logits = jnp.dot(h2.astype(jnp.bfloat16), w3,
                     preferred_element_type=jnp.float32) + b3
    return jax.nn.softmax(logits, axis=-1)[:, :num_classes]


def init_params(key, num_classes):
    """Mimics PyTorch nn.Linear default init (uniform +-1/sqrt(fan_in)).
    Weights stored transposed as (in, out), zero-padded to 128 lanes and cast to bf16
    for the MXU; biases kept f32.  Layer-3 bias padding is -1e30 so padded class
    logits contribute exactly 0 to the softmax."""
    real_dims = [(784, 64), (64, 32), (32, num_classes)]
    padded_in = [784, LANE, LANE]
    params = []
    for li, (fan_in, fan_out) in enumerate(real_dims):
        key, kw, kb = jax.random.split(key, 3)
        bound = 1.0 / jnp.sqrt(float(fan_in))
        w = jax.random.uniform(kw, (fan_in, fan_out), jnp.float32, -bound, bound)
        b = jax.random.uniform(kb, (1, fan_out), jnp.float32, -bound, bound)
        wp = jnp.zeros((padded_in[li], LANE), jnp.float32).at[:fan_in, :fan_out].set(w)
        bias_fill = NEG_BIG if li == 2 else 0.0
        bp = jnp.full((1, LANE), bias_fill, jnp.float32).at[:, :fan_out].set(b)
        params += [wp.astype(jnp.bfloat16), bp]
    return tuple(params)


if __name__ == "__main__":
    num_classes = 10
    params = init_params(jax.random.PRNGKey(0), num_classes)
    # Bind params/num_classes via closure (num_classes must stay a static slice bound).
    fwd = jax.jit(lambda xs: fnn_forward(xs, params, num_classes))

    # --- small test: batch=2, MNIST-like NCHW input ---
    key = jax.random.PRNGKey(0)
    key, kx = jax.random.split(key)
    x = jax.random.normal(kx, (2, 1, 28, 28), jnp.float32)
    out = jax.block_until_ready(fwd(x))
    assert out.shape == (2, num_classes)
    # bf16 writeback + bf16 dot operands: relaxed tolerances.
    assert bool(jnp.allclose(jnp.sum(out, axis=1), 1.0, atol=2e-2))
    ref = fnn_reference(x, params, num_classes)
    assert bool(jnp.allclose(out, ref, atol=1e-2))

    # --- larger test: multi-tile grid + ragged last tile (partial edge block, no jnp.pad) ---
    key, kx2 = jax.random.split(key)
    x_big = jax.random.normal(kx2, (517, 784), jnp.float32)
    out_big = jax.block_until_ready(fnn_forward(x_big, params, num_classes, tb=256))
    assert out_big.shape == (517, num_classes)
    assert bool(jnp.allclose(jnp.sum(out_big, axis=1), 1.0, atol=2e-2))
    ref_big = fnn_reference(x_big, params, num_classes)
    assert bool(jnp.allclose(out_big, ref_big, atol=1e-2))

    print("KERNEL_OK")
</pallas_src>

<mosaic_0001>
module attributes {stable_mosaic.version = 11 : i64} {
  func.func @fnn_kernel(%arg0: i32, %arg1: memref<2x784xf32, #tpu.memory_space<vmem>>, %arg2: memref<784x128xbf16, #tpu.memory_space<vmem>>, %arg3: memref<1x128xf32, #tpu.memory_space<vmem>>, %arg4: memref<128x128xbf16, #tpu.memory_space<vmem>>, %arg5: memref<1x128xf32, #tpu.memory_space<vmem>>, %arg6: memref<128x128xbf16, #tpu.memory_space<vmem>>, %arg7: memref<1x128xf32, #tpu.memory_space<vmem>>, %arg8: memref<2x128xbf16, #tpu.memory_space<vmem>>) attributes {dimension_semantics = [#tpu.dimension_semantics<parallel>], iteration_bounds = array<i64: 1>, scalar_prefetch = 0 : i64, scratch_operands = 0 : i64, tpu.core_type = #tpu.core_type<tc>, window_params = [{transform_indices = @transform_0, window_bounds = array<i64: 2, 784>}, {pipeline_mode = #tpu.pipeline_mode<synchronous>, transform_indices = @transform_1, window_bounds = array<i64: 784, 128>}, {pipeline_mode = #tpu.pipeline_mode<synchronous>, transform_indices = @transform_2, window_bounds = array<i64: 1, 128>}, {pipeline_mode = #tpu.pipeline_mode<synchronous>, transform_indices = @transform_3, window_bounds = array<i64: 128, 128>}, {pipeline_mode = #tpu.pipeline_mode<synchronous>, transform_indices = @transform_4, window_bounds = array<i64: 1, 128>}, {pipeline_mode = #tpu.pipeline_mode<synchronous>, transform_indices = @transform_5, window_bounds = array<i64: 128, 128>}, {pipeline_mode = #tpu.pipeline_mode<synchronous>, transform_indices = @transform_6, window_bounds = array<i64: 1, 128>}, {transform_indices = @transform_7, window_bounds = array<i64: 2, 128>}]} {
    %c0 = arith.constant 0 : index
    %c0_0 = arith.constant 0 : index
    %0 = vector.load %arg1[%c0, %c0_0] : memref<2x784xf32, #tpu.memory_space<vmem>>, vector<2x784xf32>
    %1 = arith.truncf %0 : vector<2x784xf32> to vector<2x784xbf16>
    %c0_1 = arith.constant 0 : index
    %c0_2 = arith.constant 0 : index
    %2 = vector.load %arg2[%c0_1, %c0_2] : memref<784x128xbf16, #tpu.memory_space<vmem>>, vector<784x128xbf16>
    %cst = arith.constant dense<0.000000e+00> : vector<2x128xf32>
    %3 = tpu.matmul %1, %2, %cst {dimension_numbers = #tpu.dot_dimension_numbers<[1], [0], [0], [1], [0, 0, 1, 1], [], []>} : vector<2x784xbf16>, vector<784x128xbf16>, vector<2x128xf32> -> vector<2x128xf32>
    %c0_3 = arith.constant 0 : index
    %c0_4 = arith.constant 0 : index
    %4 = vector.load %arg3[%c0_3, %c0_4] : memref<1x128xf32, #tpu.memory_space<vmem>>, vector<1x128xf32>
    %5 = vector.broadcast %4 : vector<1x128xf32> to vector<2x128xf32>
    %6 = arith.addf %3, %5 : vector<2x128xf32>
    %7 = math.tanh %6 : vector<2x128xf32>
    %8 = arith.truncf %7 : vector<2x128xf32> to vector<2x128xbf16>
    %c0_5 = arith.constant 0 : index
    %c0_6 = arith.constant 0 : index
    %9 = vector.load %arg4[%c0_5, %c0_6] : memref<128x128xbf16, #tpu.memory_space<vmem>>, vector<128x128xbf16>
    %cst_7 = arith.constant dense<0.000000e+00> : vector<2x128xf32>
    %10 = tpu.matmul %8, %9, %cst_7 {dimension_numbers = #tpu.dot_dimension_numbers<[1], [0], [0], [1], [0, 0, 1, 1], [], []>} : vector<2x128xbf16>, vector<128x128xbf16>, vector<2x128xf32> -> vector<2x128xf32>
    %c0_8 = arith.constant 0 : index
    %c0_9 = arith.constant 0 : index
    %11 = vector.load %arg5[%c0_8, %c0_9] : memref<1x128xf32, #tpu.memory_space<vmem>>, vector<1x128xf32>
    %12 = vector.broadcast %11 : vector<1x128xf32> to vector<2x128xf32>
    %13 = arith.addf %10, %12 : vector<2x128xf32>
    %cst_10 = arith.constant 0.000000e+00 : f32
    %14 = vector.broadcast %cst_10 : f32 to vector<2x128xf32>
    %15 = arith.maximumf %13, %14 : vector<2x128xf32>
    %16 = arith.truncf %15 : vector<2x128xf32> to vector<2x128xbf16>
    %c0_11 = arith.constant 0 : index
    %c0_12 = arith.constant 0 : index
    %17 = vector.load %arg6[%c0_11, %c0_12] : memref<128x128xbf16, #tpu.memory_space<vmem>>, vector<128x128xbf16>
    %cst_13 = arith.constant dense<0.000000e+00> : vector<2x128xf32>
    %18 = tpu.matmul %16, %17, %cst_13 {dimension_numbers = #tpu.dot_dimension_numbers<[1], [0], [0], [1], [0, 0, 1, 1], [], []>} : vector<2x128xbf16>, vector<128x128xbf16>, vector<2x128xf32> -> vector<2x128xf32>
    %c0_14 = arith.constant 0 : index
    %c0_15 = arith.constant 0 : index
    %19 = vector.load %arg7[%c0_14, %c0_15] : memref<1x128xf32, #tpu.memory_space<vmem>>, vector<1x128xf32>
    %20 = vector.broadcast %19 : vector<1x128xf32> to vector<2x128xf32>
    %21 = arith.addf %18, %20 : vector<2x128xf32>
    %cst_16 = arith.constant dense<0xFF800000> : vector<2xf32>
    %22 = vector.multi_reduction <maximumf>, %21, %cst_16 [1] : vector<2x128xf32> to vector<2xf32>
    %23 = vector.shape_cast %22 : vector<2xf32> to vector<2x1xf32>
    %24 = vector.broadcast %23 : vector<2x1xf32> to vector<2x128xf32>
    %25 = arith.subf %21, %24 : vector<2x128xf32>
    %26 = math.exp %25 : vector<2x128xf32>
    %cst_17 = arith.constant dense<0.000000e+00> : vector<2xf32>
    %27 = vector.multi_reduction <add>, %26, %cst_17 [1] : vector<2x128xf32> to vector<2xf32>
    %28 = vector.shape_cast %27 : vector<2xf32> to vector<2x1xf32>
    %29 = vector.broadcast %28 : vector<2x1xf32> to vector<2x128xf32>
    %30 = arith.divf %26, %29 : vector<2x128xf32>
    %31 = arith.truncf %30 : vector<2x128xf32> to vector<2x128xbf16>
    %c0_18 = arith.constant 0 : index
    %c0_19 = arith.constant 0 : index
    %32 = vector.load %arg8[%c0_18, %c0_19] : memref<2x128xbf16, #tpu.memory_space<vmem>>, vector<2x128xbf16>
    tpu.vector_store %arg8[%c0_18, %c0_19], %31 {strides = array<i32>} : memref<2x128xbf16, #tpu.memory_space<vmem>>, vector<2x128xbf16>,
    return
  }
  func.func @transform_0(%arg0: i32) -> (i32, i32) {
    %c0_i32 = arith.constant 0 : i32
    %c0_i32_0 = arith.constant 0 : i32
    return %arg0, %c0_i32 : i32, i32
  }
  func.func @transform_1(%arg0: i32) -> (i32, i32) {
    %c0_i32 = arith.constant 0 : i32
    %c0_i32_0 = arith.constant 0 : i32
    %c0_i32_1 = arith.constant 0 : i32
    return %c0_i32, %c0_i32_0 : i32, i32
  }
  func.func @transform_2(%arg0: i32) -> (i32, i32) {
    %c0_i32 = arith.constant 0 : i32
    %c0_i32_0 = arith.constant 0 : i32
    %c0_i32_1 = arith.constant 0 : i32
    return %c0_i32, %c0_i32_0 : i32, i32
  }
  func.func @transform_3(%arg0: i32) -> (i32, i32) {
    %c0_i32 = arith.constant 0 : i32
    %c0_i32_0 = arith.constant 0 : i32
    %c0_i32_1 = arith.constant 0 : i32
    return %c0_i32, %c0_i32_0 : i32, i32
  }
  func.func @transform_4(%arg0: i32) -> (i32, i32) {
    %c0_i32 = arith.constant 0 : i32
    %c0_i32_0 = arith.constant 0 : i32
    %c0_i32_1 = arith.constant 0 : i32
    return %c0_i32, %c0_i32_0 : i32, i32
  }
  func.func @transform_5(%arg0: i32) -> (i32, i32) {
    %c0_i32 = arith.constant 0 : i32
    %c0_i32_0 = arith.constant 0 : i32
    %c0_i32_1 = arith.constant 0 : i32
    return %c0_i32, %c0_i32_0 : i32, i32
  }
  func.func @transform_6(%arg0: i32) -> (i32, i32) {
    %c0_i32 = arith.constant 0 : i32
    %c0_i32_0 = arith.constant 0 : i32
    %c0_i32_1 = arith.constant 0 : i32
    return %c0_i32, %c0_i32_0 : i32, i32
  }
  func.func @transform_7(%arg0: i32) -> (i32, i32) {
    %c0_i32 = arith.constant 0 : i32
    %c0_i32_0 = arith.constant 0 : i32
    return %arg0, %c0_i32 : i32, i32
  }
}

</mosaic_0001>

<llo_original>
// kernel: _lambda_.1
$region0: #{_lambda_.1}
  #allocation0 [shape = 'u32[]', space=smem, size = 0x4, offset = 0x4, fixed_abs, tag = 'smem constant byte address 0x4 - core index']
  #allocation1 [shape = 'u32[144,128]{1,0:T(1,128)}', space=vmem, size = 0x12000, scoped, tag = 'internal scratch']
  %s0 = inlined_call_operand.vmem [shape: f32[2,784], index: 0, kind: input, shape index: {}]
  %s1 = inlined_call_operand.hbm [shape: bf16[784,128], index: 1, kind: input, shape index: {}]
  %s2 = inlined_call_operand.vmem [shape: f32[1,128], index: 2, kind: input, shape index: {}]
  %s3 = inlined_call_operand.vmem [shape: bf16[128,128], index: 3, kind: input, shape index: {}]
  %s4 = inlined_call_operand.vmem [shape: f32[1,128], index: 4, kind: input, shape index: {}]
  %s5 = inlined_call_operand.vmem [shape: bf16[128,128], index: 5, kind: input, shape index: {}]
  %s6 = inlined_call_operand.vmem [shape: f32[1,128], index: 6, kind: input, shape index: {}]
  %s7 = inlined_call_operand.vmem [shape: bf16[2,128], index: 7, kind: output, shape index: {}]
  %s8 = sld [smem:[#allocation0]]
  $region42: #{_lambda_.1} parent=0
    _
  %s10 = ssub.s32 1, %s8
  %s11 = scalar_select 0, %s10, %s8
  $region1: #{_lambda_.1} parent=0
    #allocation2 [shape = 'u8[200704]{0}', space=vmem, size = 0x31000, scoped, tag = 'input window, operand 1, single buffered']
    #allocation3 [shape = 's32[1]{0}', space=sflag, size = 0x4, scoped, tag = 'scoped memory for _lambda_.1']
    %12 = vsyncpa [#allocation3], 0
    // Predicated region
    $region2: #{_lambda_.1} parent=1 // pred_check
      _
    $region3: #{_lambda_.1} parent=1 // pred_check_branch
      %14 = sbr.rel (0) target = $region5
    $region4: #{_lambda_.1} parent=1 // pred_region
      _
    $region5: #{_lambda_.1} parent=1 // pred_fallthru
      _
    // Predicated region
    $region6: #{_lambda_.1} parent=1 // pred_check
      _
    $region7: #{_lambda_.1} parent=1 // pred_check_branch
      %16 = sbr.rel (0) target = $region9
    $region8: #{_lambda_.1} parent=1 // pred_region
      %s18 = ssub.s32 6272, 6272
      %19 = vsyncadd [#allocation3], %s18
      %s20 = sshll.u32 [#allocation2], 4
      %s21 = int_to_ptr.vmem [resolvable:$true] %s20
      %26 = dma.hbm_to_vmem [thread:$0]  %s1, 6272, %s21, [#allocation3], 64, 64, 4
    $region9: #{_lambda_.1} parent=1 // pred_fallthru
      _
    // Predicated region
    $region10: #{_lambda_.1} parent=1 // pred_check
      _
    $region11: #{_lambda_.1} parent=1 // pred_check_branch
      %28 = sbr.rel (0) target = $region13
    $region12: #{_lambda_.1} parent=1 // pred_region
      _
    $region13: #{_lambda_.1} parent=1 // pred_fallthru
      _
    // Predicated region
    $region14: #{_lambda_.1} parent=1 // pred_check
      _
    $region15: #{_lambda_.1} parent=1 // pred_check_branch
      %30 = sbr.rel (0) target = $region17
    $region16: #{_lambda_.1} parent=1 // pred_region
      _
    $region17: #{_lambda_.1} parent=1 // pred_fallthru
      _
    // Predicated region
    $region18: #{_lambda_.1} parent=1 // pred_check
      _
    $region19: #{_lambda_.1} parent=1 // pred_check_branch
      %32 = sbr.rel (0) target = $region21
    $region20: #{_lambda_.1} parent=1 // pred_region
      _
    $region21: #{_lambda_.1} parent=1 // pred_fallthru
      _
    // Predicated region
    $region22: #{_lambda_.1} parent=1 // pred_check
      _
    $region23: #{_lambda_.1} parent=1 // pred_check_branch
      %34 = sbr.rel (0) target = $region25
    $region24: #{_lambda_.1} parent=1 // pred_region
      _
    $region25: #{_lambda_.1} parent=1 // pred_fallthru
      _
    // Predicated region
    $region26: #{_lambda_.1} parent=1 // pred_check
      _
    $region27: #{_lambda_.1} parent=1 // pred_check_branch
      %36 = sbr.rel (0) target = $region29
    $region28: #{_lambda_.1} parent=1 // pred_region
      _
    $region29: #{_lambda_.1} parent=1 // pred_fallthru
      _
    // Predicated region
    $region30: #{_lambda_.1} parent=1 // pred_check
      _
    $region31: #{_lambda_.1} parent=1 // pred_check_branch
      %38 = sbr.rel (0) target = $region33
    $region32: #{_lambda_.1} parent=1 // pred_region
      %39 = dma.done [#allocation3], 6272
    $region33: #{_lambda_.1} parent=1 // pred_fallthru
      _
    %v41 = vld [vmem:[%s0] sm:$0xff]
    %v42 = vld [vmem:[%s0 + $0x8] sm:$0x3f]
    %v45 = vcombine.high %v41, %v41
    %v47 = vunpack.c.l.s4 1983009808
    %v48 = vunpack.c.0.s8 %v47
    %v49 = vlaneseq
    %v50 = vshrl.u32 %v49, 7
    %v51 = vsub.s32 %v48, %v50
    %v52 = vrot.slane %v41, %v51
    %v54 = vunpack.c.l.s4 1983009808
    %v55 = vunpack.c.0.s8 %v54
    %v56 = vlaneseq
    %v57 = vshrl.u32 %v56, 7
    %v58 = vsub.s32 %v55, %v57
    %v59 = vrot.slane %v45, %v58
    %v60 = vcombine.high %v52, %v52
    %v61 = vcombine.high %v59, %v59
    %v62 = vcombine.high %v42, %v42
    %v64 = vunpack.c.l.s4 1983009808
    %v65 = vunpack.c.0.s8 %v64
    %v66 = vlaneseq
    %v67 = vshrl.u32 %v66, 7
    %v68 = vsub.s32 %v65, %v67
    %v69 = vrot.slane %v42, %v68
    %v71 = vunpack.c.l.s4 1983009808
    %v72 = vunpack.c.0.s8 %v71
    %v73 = vlaneseq
    %v74 = vshrl.u32 %v73, 7
    %v75 = vsub.s32 %v72, %v74
    %v76 = vrot.slane %v62, %v75
    %v77 = vcombine.high %v69, %v69
    %v85 = vpack.c.bf16 %v52, %v52
    %v86 = vpack.c.bf16 %v60, %v60
    %v87 = vpack.c.bf16 %v59, %v59
    %v88 = vpack.c.bf16 %v61, %v61
    %v89 = vpack.c.bf16 %v69, %v69
    %v90 = vpack.c.bf16 %v77, %v77
    %v91 = vpack.c.bf16 %v76, %v76
    %v92 = vld [vmem:[#allocation2] sm:$0xf]
    %v93 = vld [vmem:[#allocation2 + $0x4] sm:$0xf]
    %v94 = vld [vmem:[#allocation2 + $0x8] sm:$0xf]
    %v95 = vld [vmem:[#allocation2 + $0xc] sm:$0xf]
    %v96 = vld [vmem:[#allocation2 + $0x10] sm:$0xf]
    %v97 = vld [vmem:[#allocation2 + $0x14] sm:$0xf]
    %v98 = vld [vmem:[#allocation2 + $0x18] sm:$0xf]
    %v99 = vld [vmem:[#allocation2 + $0x1c] sm:$0xf]
    %v100 = vld [vmem:[#allocation2 + $0x20] sm:$0xf]
    %v101 = vld [vmem:[#allocation2 + $0x24] sm:$0xf]
    %v102 = vld [vmem:[#allocation2 + $0x28] sm:$0xf]
    %v103 = vld [vmem:[#allocation2 + $0x2c] sm:$0xf]
    %v104 = vld [vmem:[#allocation2 + $0x30] sm:$0xf]
    %v105 = vld [vmem:[#allocation2 + $0x34] sm:$0xf]
    %v106 = vld [vmem:[#allocation2 + $0x38] sm:$0xf]
    %v107 = vld [vmem:[#allocation2 + $0x3c] sm:$0xf]
    %v108 = vld [vmem:[#allocation2 + $0x40] sm:$0xf]
    %v109 = vld [vmem:[#allocation2 + $0x44] sm:$0xf]
    %v110 = vld [vmem:[#allocation2 + $0x48] sm:$0xf]
    %v111 = vld [vmem:[#allocation2 + $0x4c] sm:$0xf]
    %v112 = vld [vmem:[#allocation2 + $0x50] sm:$0xf]
    %v113 = vld [vmem:[#allocation2 + $0x54] sm:$0xf]
    %v114 = vld [vmem:[#allocation2 + $0x58] sm:$0xf]
    %v115 = vld [vmem:[#allocation2 + $0x5c] sm:$0xf]
    %v116 = vld [vmem:[#allocation2 + $0x60] sm:$0xf]
    %v117 = vld [vmem:[#allocation2 + $0x64] sm:$0xf]
    %v118 = vld [vmem:[#allocation2 + $0x68] sm:$0xf]
    %v119 = vld [vmem:[#allocation2 + $0x6c] sm:$0xf]
    %v120 = vld [vmem:[#allocation2 + $0x70] sm:$0xf]
    %v121 = vld [vmem:[#allocation2 + $0x74] sm:$0xf]
    %v122 = vld [vmem:[#allocation2 + $0x78] sm:$0xf]
    %v123 = vld [vmem:[#allocation2 + $0x7c] sm:$0xf]
    %v124 = vld [vmem:[#allocation2 + $0x80] sm:$0xf]
    %v125 = vld [vmem:[#allocation2 + $0x84] sm:$0xf]
    %v126 = vld [vmem:[#allocation2 + $0x88] sm:$0xf]
    %v127 = vld [vmem:[#allocation2 + $0x8c] sm:$0xf]
    %v128 = vld [vmem:[#allocation2 + $0x90] sm:$0xf]
    %v129 = vld [vmem:[#allocation2 + $0x94] sm:$0xf]
    %v130 = vld [vmem:[#allocation2 + $0x98] sm:$0xf]
    %v131 = vld [vmem:[#allocation2 + $0x9c] sm:$0xf]
    %v132 = vld [vmem:[#allocation2 + $0xa0] sm:$0xf]
    %v133 = vld [vmem:[#allocation2 + $0xa4] sm:$0xf]
    %v134 = vld [vmem:[#allocation2 + $0xa8] sm:$0xf]
    %v135 = vld [vmem:[#allocation2 + $0xac] sm:$0xf]
    %v136 = vld [vmem:[#allocation2 + $0xb0] sm:$0xf]
    %v137 = vld [vmem:[#allocation2 + $0xb4] sm:$0xf]
    %v138 = vld [vmem:[#allocation2 + $0xb8] sm:$0xf]
    %v139 = vld [vmem:[#allocation2 + $0xbc] sm:$0xf]
    %v140 = vld [vmem:[#allocation2 + $0xc0] sm:$0xf]
    %v141 = vld [vmem:[#allocation2 + $0xc4] sm:$0xf]
    %v142 = vld [vmem:[#allocation2 + $0xc8] sm:$0xf]
    %v143 = vld [vmem:[#allocation2 + $0xcc] sm:$0xf]
    %v144 = vld [vmem:[#allocation2 + $0xd0] sm:$0xf]
    %v145 = vld [vmem:[#allocation2 + $0xd4] sm:$0xf]
    %v146 = vld [vmem:[#allocation2 + $0xd8] sm:$0xf]
    %v147 = vld [vmem:[#allocation2 + $0xdc] sm:$0xf]
    %v148 = vld [vmem:[#allocation2 + $0xe0] sm:$0xf]
    %v149 = vld [vmem:[#allocation2 + $0xe4] sm:$0xf]
    %v150 = vld [vmem:[#allocation2 + $0xe8] sm:$0xf]
    %v151 = vld [vmem:[#allocation2 + $0xec] sm:$0xf]
    %v152 = vld [vmem:[#allocation2 + $0xf0] sm:$0xf]
    %v153 = vld [vmem:[#allocation2 + $0xf4] sm:$0xf]
    %v154 = vld [vmem:[#allocation2 + $0xf8] sm:$0xf]
    %v155 = vld [vmem:[#allocation2 + $0xfc] sm:$0xf]
    %v156 = vld [vmem:[#allocation2 + $0x100] sm:$0xf]
    %v157 = vld [vmem:[#allocation2 + $0x104] sm:$0xf]
    %v158 = vld [vmem:[#allocation2 + $0x108] sm:$0xf]
    %v159 = vld [vmem:[#allocation2 + $0x10c] sm:$0xf]
    %v160 = vld [vmem:[#allocation2 + $0x110] sm:$0xf]
    %v161 = vld [vmem:[#allocation2 + $0x114] sm:$0xf]
    %v162 = vld [vmem:[#allocation2 + $0x118] sm:$0xf]
    %v163 = vld [vmem:[#allocation2 + $0x11c] sm:$0xf]
    %v164 = vld [vmem:[#allocation2 + $0x120] sm:$0xf]
    %v165 = vld [vmem:[#allocation2 + $0x124] sm:$0xf]
    %v166 = vld [vmem:[#allocation2 + $0x128] sm:$0xf]
    %v167 = vld [vmem:[#allocation2 + $0x12c] sm:$0xf]
    %v168 = vld [vmem:[#allocation2 + $0x130] sm:$0xf]
    %v169 = vld [vmem:[#allocation2 + $0x134] sm:$0xf]
    %v170 = vld [vmem:[#allocation2 + $0x138] sm:$0xf]
    %v171 = vld [vmem:[#allocation2 + $0x13c] sm:$0xf]
    %v172 = vld [vmem:[#allocation2 + $0x140] sm:$0xf]
    %v173 = vld [vmem:[#allocation2 + $0x144] sm:$0xf]
    %v174 = vld [vmem:[#allocation2 + $0x148] sm:$0xf]
    %v175 = vld [vmem:[#allocation2 + $0x14c] sm:$0xf]
    %v176 = vld [vmem:[#allocation2 + $0x150] sm:$0xf]
    %v177 = vld [vmem:[#allocation2 + $0x154] sm:$0xf]
    %v178 = vld [vmem:[#allocation2 + $0x158] sm:$0xf]
    %v179 = vld [vmem:[#allocation2 + $0x15c] sm:$0xf]
    %v180 = vld [vmem:[#allocation2 + $0x160] sm:$0xf]
    %v181 = vld [vmem:[#allocation2 + $0x164] sm:$0xf]
    %v182 = vld [vmem:[#allocation2 + $0x168] sm:$0xf]
    %v183 = vld [vmem:[#allocation2 + $0x16c] sm:$0xf]
    %v184 = vld [vmem:[#allocation2 + $0x170] sm:$0xf]
    %v185 = vld [vmem:[#allocation2 + $0x174] sm:$0xf]
    %v186 = vld [vmem:[#allocation2 + $0x178] sm:$0xf]
    %v187 = vld [vmem:[#allocation2 + $0x17c] sm:$0xf]
    %v188 = vld [vmem:[#allocation2 + $0x180] sm:$0xf]
    %v189 = vld [vmem:[#allocation2 + $0x184] sm:$0xf]
    %v190 = vld [vmem:[%s2] sm:$0x1]
    %v192 = vlaneseq
    %v193 = vshrl.u32 %v192, 7
    %v194 = vsub.s32 0, %v193
    %v195 = vrot.slane %v190, %v194
    %v295 = vunpack.c.l.b16 %v92
    %v296 = vunpack.c.l.b16 %v93
    %v297 = vunpack.c.l.b16 %v94
    %v298 = vunpack.c.l.b16 %v95
    %v299 = vunpack.c.l.b16 %v96
    %v300 = vunpack.c.l.b16 %v97
    %v301 = vunpack.c.l.b16 %v98
    %v302 = vunpack.c.l.b16 %v99
    %v303 = vunpack.c.l.b16 %v100
    %v304 = vunpack.c.l.b16 %v101
    %v305 = vunpack.c.l.b16 %v102
    %v306 = vunpack.c.l.b16 %v103
    %v307 = vunpack.c.l.b16 %v104
    %v308 = vunpack.c.l.b16 %v105
    %v309 = vunpack.c.l.b16 %v106
    %v310 = vunpack.c.l.b16 %v107
    %v311 = vunpack.c.l.b16 %v108
    %v312 = vunpack.c.l.b16 %v109
    %v313 = vunpack.c.l.b16 %v110
    %v314 = vunpack.c.l.b16 %v111
    %v315 = vunpack.c.l.b16 %v112
    %v316 = vunpack.c.l.b16 %v113
    %v317 = vunpack.c.l.b16 %v114
    %v318 = vunpack.c.l.b16 %v115
    %v319 = vunpack.c.l.b16 %v116
    %v320 = vunpack.c.l.b16 %v117
    %v321 = vunpack.c.l.b16 %v118
    %v322 = vunpack.c.l.b16 %v119
    %v323 = vunpack.c.l.b16 %v120
    %v324 = vunpack.c.l.b16 %v121
    %v325 = vunpack.c.l.b16 %v122
    %v326 = vunpack.c.l.b16 %v123
    %v327 = vunpack.c.l.b16 %v124
    %v328 = vunpack.c.l.b16 %v125
    %v329 = vunpack.c.l.b16 %v126
    %v330 = vunpack.c.l.b16 %v127
    %v331 = vunpack.c.l.b16 %v128
    %v332 = vunpack.c.l.b16 %v129
    %v333 = vunpack.c.l.b16 %v130
    %v334 = vunpack.c.l.b16 %v131
    %v335 = vunpack.c.l.b16 %v132
    %v336 = vunpack.c.l.b16 %v133
    %v337 = vunpack.c.l.b16 %v134
    %v338 = vunpack.c.l.b16 %v135
    %v339 = vunpack.c.l.b16 %v136
    %v340 = vunpack.c.l.b16 %v137
    %v341 = vunpack.c.l.b16 %v138
    %v342 = vunpack.c.l.b16 %v139
    %v343 = vunpack.c.l.b16 %v140
    %v344 = vunpack.c.l.b16 %v141
    %v345 = vunpack.c.l.b16 %v142
    %v346 = vunpack.c.l.b16 %v143
    %v347 = vunpack.c.l.b16 %v144
    %v348 = vunpack.c.l.b16 %v145
    %v349 = vunpack.c.l.b16 %v146
    %v350 = vunpack.c.l.b16 %v147
    %v351 = vunpack.c.l.b16 %v148
    %v352 = vunpack.c.l.b16 %v149
    %v353 = vunpack.c.l.b16 %v150
    %v354 = vunpack.c.l.b16 %v151
    %v355 = vunpack.c.l.b16 %v152
    %v356 = vunpack.c.l.b16 %v153
    %v357 = vunpack.c.l.b16 %v154
    %v358 = vunpack.c.l.b16 %v155
    %v359 = vunpack.c.l.b16 %v156
    %v360 = vunpack.c.l.b16 %v157
    %v361 = vunpack.c.l.b16 %v158
    %v362 = vunpack.c.l.b16 %v159
    %v363 = vunpack.c.l.b16 %v160
    %v364 = vunpack.c.l.b16 %v161
    %v365 = vunpack.c.l.b16 %v162
    %v366 = vunpack.c.l.b16 %v163
    %v367 = vunpack.c.l.b16 %v164
    %v368 = vunpack.c.l.b16 %v165
    %v369 = vunpack.c.l.b16 %v166
    %v370 = vunpack.c.l.b16 %v167
    %v371 = vunpack.c.l.b16 %v168
    %v372 = vunpack.c.l.b16 %v169
    %v373 = vunpack.c.l.b16 %v170
    %v374 = vunpack.c.l.b16 %v171
    %v375 = vunpack.c.l.b16 %v172
    %v376 = vunpack.c.l.b16 %v173
    %v377 = vunpack.c.l.b16 %v174
    %v378 = vunpack.c.l.b16 %v175
    %v379 = vunpack.c.l.b16 %v176
    %v380 = vunpack.c.l.b16 %v177
    %v381 = vunpack.c.l.b16 %v178
    %v382 = vunpack.c.l.b16 %v179
    %v383 = vunpack.c.l.b16 %v180
    %v384 = vunpack.c.l.b16 %v181
    %v385 = vunpack.c.l.b16 %v182
    %v386 = vunpack.c.l.b16 %v183
    %v387 = vunpack.c.l.b16 %v184
    %v388 = vunpack.c.l.b16 %v185
    %v389 = vunpack.c.l.b16 %v186
    %v390 = vunpack.c.l.b16 %v187
    %v391 = vunpack.c.l.b16 %v188
    %v392 = vunpack.c.l.b16 %v189
    %v393 = vpack.c.b16 %v296, %v295
    %v394 = vpack.c.b16 %v298, %v297
    %v395 = vpack.c.b16 %v300, %v299
    %v396 = vpack.c.b16 %v302, %v301
    %v397 = vpack.c.b16 %v304, %v303
    %v398 = vpack.c.b16 %v306, %v305
    %v399 = vpack.c.b16 %v308, %v307
    %v400 = vpack.c.b16 %v310, %v309
    %v401 = vpack.c.b16 %v312, %v311
    %v402 = vpack.c.b16 %v314, %v313
    %v403 = vpack.c.b16 %v316, %v315
    %v404 = vpack.c.b16 %v318, %v317
    %v405 = vpack.c.b16 %v320, %v319
    %v406 = vpack.c.b16 %v322, %v321
    %v407 = vpack.c.b16 %v324, %v323
    %v408 = vpack.c.b16 %v326, %v325
    %v409 = vpack.c.b16 %v328, %v327
    %v410 = vpack.c.b16 %v330, %v329
    %v411 = vpack.c.b16 %v332, %v331
    %v412 = vpack.c.b16 %v334, %v333
    %v413 = vpack.c.b16 %v336, %v335
    %v414 = vpack.c.b16 %v338, %v337
    %v415 = vpack.c.b16 %v340, %v339
    %v416 = vpack.c.b16 %v342, %v341
    %v417 = vpack.c.b16 %v344, %v343
    %v418 = vpack.c.b16 %v346, %v345
    %v419 = vpack.c.b16 %v348, %v347
    %v420 = vpack.c.b16 %v350, %v349
    %v421 = vpack.c.b16 %v352, %v351
    %v422 = vpack.c.b16 %v354, %v353
    %v423 = vpack.c.b16 %v356, %v355
    %v424 = vpack.c.b16 %v358, %v357
    %v425 = vpack.c.b16 %v360, %v359
    %v426 = vpack.c.b16 %v362, %v361
    %v427 = vpack.c.b16 %v364, %v363
    %v428 = vpack.c.b16 %v366, %v365
    %v429 = vpack.c.b16 %v368, %v367
    %v430 = vpack.c.b16 %v370, %v369
    %v431 = vpack.c.b16 %v372, %v371
    %v432 = vpack.c.b16 %v374, %v373
    %v433 = vpack.c.b16 %v376, %v375
    %v434 = vpack.c.b16 %v378, %v377
    %v435 = vpack.c.b16 %v380, %v379
    %v436 = vpack.c.b16 %v382, %v381
    %v437 = vpack.c.b16 %v384, %v383
    %v438 = vpack.c.b16 %v386, %v385
    %v439 = vpack.c.b16 %v388, %v387
    %v440 = vpack.c.b16 %v390, %v389
    %v441 = vpack.c.b16 %v392, %v391
    %vm491 = vcmask 130048
    %v493 = vsel %vm491, %v91, 0
    %495 = vmatprep.subr.bf16.mxu0 0
    %496 = vmatpush1.bf16.msra.mxu0 %v393
    %497 = vmatprep.subr.bf16.mxu0 0
    %498 = vmatpush1.bf16.msra.mxu0 %v394
    %499 = vmatprep.subr.bf16.mxu0 0
    %500 = vmatpush1.bf16.msra.mxu0 %v395
    %501 = vmatprep.subr.bf16.mxu0 0
    %502 = vmatpush1.bf16.msra.mxu0 %v396
    %503 = vmatprep.subr.bf16.mxu0 0
    %504 = vmatpush1.bf16.msra.mxu0 %v397
    %505 = vmatprep.subr.bf16.mxu0 0
    %506 = vmatpush1.bf16.msra.mxu0 %v398
    %507 = vmatprep.subr.bf16.mxu0 0
    %508 = vmatpush1.bf16.msra.mxu0 %v399
    %509 = vmatprep.subr.bf16.mxu0 0
    %510 = vmatpush1.bf16.msra.mxu0 %v400
    %511 = vmatprep.subr.bf16.mxu0 0
    %512 = vmatpush1.bf16.msra.mxu0 %v401
    %513 = vmatprep.subr.bf16.mxu0 0
    %514 = vmatpush1.bf16.msra.mxu0 %v402
    %515 = vmatprep.subr.bf16.mxu0 0
    %516 = vmatpush1.bf16.msra.mxu0 %v403
    %517 = vmatprep.subr.bf16.mxu0 0
    %518 = vmatpush1.bf16.msra.mxu0 %v404
    %519 = vmatprep.subr.bf16.mxu0 0
    %520 = vmatpush1.bf16.msra.mxu0 %v405
    %521 = vmatprep.subr.bf16.mxu0 0
    %522 = vmatpush1.bf16.msra.mxu0 %v406
    %523 = vmatprep.subr.bf16.mxu0 0
    %524 = vmatpush1.bf16.msra.mxu0 %v407
    %525 = vmatprep.subr.bf16.mxu0 0
    %526 = vmatpush1.bf16.msra.mxu0 %v408
    %527 = vmatprep.mubr.bf16.mxu0 %v86
    %528 = vmatmul.mubr.bf16.gmra.mrb[0].mxu0 %v85
    %v529 = vpop.f32.mrb[0].mxu0
    %v530 = vadd.f32 %v195, %v529
    %v531 = vpop.f32.mrb[0].mxu0
    %v532 = vpop.f32.mrb[0].mxu0
    %v533 = vpop.f32.mrb[0].mxu0
    %534 = vdwg.mxu0
    %535 = vmatprep.subr.bf16.mxu0 0
    %536 = vmatpush1.bf16.msra.mxu0 %v409
    %537 = vmatprep.subr.bf16.mxu0 0
    %538 = vmatpush1.bf16.msra.mxu0 %v410
    %539 = vmatprep.subr.bf16.mxu0 0
    %540 = vmatpush1.bf16.msra.mxu0 %v411
    %541 = vmatprep.subr.bf16.mxu0 0
    %542 = vmatpush1.bf16.msra.mxu0 %v412
    %543 = vmatprep.subr.bf16.mxu0 0
    %544 = vmatpush1.bf16.msra.mxu0 %v413
    %545 = vmatprep.subr.bf16.mxu0 0
    %546 = vmatpush1.bf16.msra.mxu0 %v414
    %547 = vmatprep.subr.bf16.mxu0 0
    %548 = vmatpush1.bf16.msra.mxu0 %v415
    %549 = vmatprep.subr.bf16.mxu0 0
    %550 = vmatpush1.bf16.msra.mxu0 %v416
    %551 = vmatprep.subr.bf16.mxu0 0
    %552 = vmatpush1.bf16.msra.mxu0 %v417
    %553 = vmatprep.subr.bf16.mxu0 0
    %554 = vmatpush1.bf16.msra.mxu0 %v418
    %555 = vmatprep.subr.bf16.mxu0 0
    %556 = vmatpush1.bf16.msra.mxu0 %v419
    %557 = vmatprep.subr.bf16.mxu0 0
    %558 = vmatpush1.bf16.msra.mxu0 %v420
    %559 = vmatprep.subr.bf16.mxu0 0
    %560 = vmatpush1.bf16.msra.mxu0 %v421
    %561 = vmatprep.subr.bf16.mxu0 0
    %562 = vmatpush1.bf16.msra.mxu0 %v422
    %563 = vmatprep.subr.bf16.mxu0 0
    %564 = vmatpush1.bf16.msra.mxu0 %v423
    %565 = vmatprep.subr.bf16.mxu0 0
    %566 = vmatpush1.bf16.msra.mxu0 %v424
    %567 = vmatprep.mubr.bf16.mxu0 %v88
    %568 = vmatmul.mubr.bf16.gmra.mrb[0].mxu0 %v87
    %v569 = vpop.f32.mrb[0].mxu0
    %v570 = vadd.f32 %v530, %v569
    %v571 = vpop.f32.mrb[0].mxu0
    %v572 = vpop.f32.mrb[0].mxu0
    %v573 = vpop.f32.mrb[0].mxu0
    %574 = vdwg.mxu0
    %575 = vmatprep.subr.bf16.mxu0 0
    %576 = vmatpush1.bf16.msra.mxu0 %v425
    %577 = vmatprep.subr.bf16.mxu0 0
    %578 = vmatpush1.bf16.msra.mxu0 %v426
    %579 = vmatprep.subr.bf16.mxu0 0
    %580 = vmatpush1.bf16.msra.mxu0 %v427
    %581 = vmatprep.subr.bf16.mxu0 0
    %582 = vmatpush1.bf16.msra.mxu0 %v428
    %583 = vmatprep.subr.bf16.mxu0 0
    %584 = vmatpush1.bf16.msra.mxu0 %v429
    %585 = vmatprep.subr.bf16.mxu0 0
    %586 = vmatpush1.bf16.msra.mxu0 %v430
    %587 = vmatprep.subr.bf16.mxu0 0
    %588 = vmatpush1.bf16.msra.mxu0 %v431
    %589 = vmatprep.subr.bf16.mxu0 0
    %590 = vmatpush1.bf16.msra.mxu0 %v432
    %591 = vmatprep.subr.bf16.mxu0 0
    %592 = vmatpush1.bf16.msra.mxu0 %v433
    %593 = vmatprep.subr.bf16.mxu0 0
    %594 = vmatpush1.bf16.msra.mxu0 %v434
    %595 = vmatprep.subr.bf16.mxu0 0
    %596 = vmatpush1.bf16.msra.mxu0 %v435
    %597 = vmatprep.subr.bf16.mxu0 0
    %598 = vmatpush1.bf16.msra.mxu0 %v436
    %599 = vmatprep.subr.bf16.mxu0 0
    %600 = vmatpush1.bf16.msra.mxu0 %v437
    %601 = vmatprep.subr.bf16.mxu0 0
    %602 = vmatpush1.bf16.msra.mxu0 %v438
    %603 = vmatprep.subr.bf16.mxu0 0
    %604 = vmatpush1.bf16.msra.mxu0 %v439
    %605 = vmatprep.subr.bf16.mxu0 0
    %606 = vmatpush1.bf16.msra.mxu0 %v440
    %607 = vmatprep.mubr.bf16.mxu0 %v90
    %608 = vmatmul.mubr.bf16.gmra.mrb[0].mxu0 %v89
    %v609 = vpop.f32.mrb[0].mxu0
    %v610 = vadd.f32 %v570, %v609
    %v611 = vpop.f32.mrb[0].mxu0
    %v612 = vpop.f32.mrb[0].mxu0
    %v613 = vpop.f32.mrb[0].mxu0
    %614 = vdwg.mxu0
    %615 = vmatprep.subr.bf16.mxu0 0
    %616 = vmatpush1.bf16.msra.mxu0 %v441
    %617 = vmatprep.subr.bf16.mxu0 0
    %618 = vmatpush1.bf16.msra.mxu0 0
    %619 = vmatprep.subr.bf16.mxu0 0
    %620 = vmatpush1.bf16.msra.mxu0 0
    %621 = vmatprep.subr.bf16.mxu0 0
    %622 = vmatpush1.bf16.msra.mxu0 0
    %623 = vmatprep.subr.bf16.mxu0 0
    %624 = vmatpush1.bf16.msra.mxu0 0
    %625 = vmatprep.subr.bf16.mxu0 0
    %626 = vmatpush1.bf16.msra.mxu0 0
    %627 = vmatprep.subr.bf16.mxu0 0
    %628 = vmatpush1.bf16.msra.mxu0 0
    %629 = vmatprep.subr.bf16.mxu0 0
    %630 = vmatpush1.bf16.msra.mxu0 0
    %631 = vmatprep.subr.bf16.mxu0 0
    %632 = vmatpush1.bf16.msra.mxu0 0
    %633 = vmatprep.subr.bf16.mxu0 0
    %634 = vmatpush1.bf16.msra.mxu0 0
    %635 = vmatprep.subr.bf16.mxu0 0
    %636 = vmatpush1.bf16.msra.mxu0 0
    %637 = vmatprep.subr.bf16.mxu0 0
    %638 = vmatpush1.bf16.msra.mxu0 0
    %639 = vmatprep.subr.bf16.mxu0 0
    %640 = vmatpush1.bf16.msra.mxu0 0
    %641 = vmatprep.subr.bf16.mxu0 0
    %642 = vmatpush1.bf16.msra.mxu0 0
    %643 = vmatprep.subr.bf16.mxu0 0
    %644 = vmatpush1.bf16.msra.mxu0 0
    %645 = vmatprep.subr.bf16.mxu0 0
    %646 = vmatpush1.bf16.msra.mxu0 0
    %647 = vmatprep.mubr.bf16.mxu0 0
    %648 = vmatmul.mubr.bf16.gmra.mrb[0].mxu0 %v493
    %v649 = vpop.f32.mrb[0].mxu0
    %v650 = vadd.f32 %v610, %v649
    %v651 = vpop.f32.mrb[0].mxu0
    %v652 = vpop.f32.mrb[0].mxu0
    %v653 = vpop.f32.mrb[0].mxu0
    %654 = vdwg.mxu0
    %v655 = vtanh.pop %v650
    %v656 = vpack.c.bf16 %v655, %v655
    %v657 = vld [vmem:[%s3] sm:$0xf]
    %v658 = vld [vmem:[%s3 + $0x4] sm:$0xf]
    %v659 = vld [vmem:[%s3 + $0x8] sm:$0xf]
    %v660 = vld [vmem:[%s3 + $0xc] sm:$0xf]
    %v661 = vld [vmem:[%s3 + $0x10] sm:$0xf]
    %v662 = vld [vmem:[%s3 + $0x14] sm:$0xf]
    %v663 = vld [vmem:[%s3 + $0x18] sm:$0xf]
    %v664 = vld [vmem:[%s3 + $0x1c] sm:$0xf]
    %v665 = vld [vmem:[%s3 + $0x20] sm:$0xf]
    %v666 = vld [vmem:[%s3 + $0x24] sm:$0xf]
    %v667 = vld [vmem:[%s3 + $0x28] sm:$0xf]
    %v668 = vld [vmem:[%s3 + $0x2c] sm:$0xf]
    %v669 = vld [vmem:[%s3 + $0x30] sm:$0xf]
    %v670 = vld [vmem:[%s3 + $0x34] sm:$0xf]
    %v671 = vld [vmem:[%s3 + $0x38] sm:$0xf]
    %v672 = vld [vmem:[%s3 + $0x3c] sm:$0xf]
    %v673 = vld [vmem:[%s4] sm:$0x1]
    %v675 = vlaneseq
    %v676 = vshrl.u32 %v675, 7
    %v677 = vsub.s32 0, %v676
    %v678 = vrot.slane %v673, %v677
    %v696 = vunpack.c.l.b16 %v657
    %v697 = vunpack.c.l.b16 %v658
    %v698 = vunpack.c.l.b16 %v659
    %v699 = vunpack.c.l.b16 %v660
    %v700 = vunpack.c.l.b16 %v661
    %v701 = vunpack.c.l.b16 %v662
    %v702 = vunpack.c.l.b16 %v663
    %v703 = vunpack.c.l.b16 %v664
    %v704 = vunpack.c.l.b16 %v665
    %v705 = vunpack.c.l.b16 %v666
    %v706 = vunpack.c.l.b16 %v667
    %v707 = vunpack.c.l.b16 %v668
    %v708 = vunpack.c.l.b16 %v669
    %v709 = vunpack.c.l.b16 %v670
    %v710 = vunpack.c.l.b16 %v671
    %v711 = vunpack.c.l.b16 %v672
    %v712 = vpack.c.b16 %v697, %v696
    %v713 = vpack.c.b16 %v699, %v698
    %v714 = vpack.c.b16 %v701, %v700
    %v715 = vpack.c.b16 %v703, %v702
    %v716 = vpack.c.b16 %v705, %v704
    %v717 = vpack.c.b16 %v707, %v706
    %v718 = vpack.c.b16 %v709, %v708
    %v719 = vpack.c.b16 %v711, %v710
    %728 = vmatprep.subr.bf16.mxu0 0
    %729 = vmatpush1.bf16.msra.mxu0 %v712
    %730 = vmatprep.subr.bf16.mxu0 0
    %731 = vmatpush1.bf16.msra.mxu0 %v713
    %732 = vmatprep.subr.bf16.mxu0 0
    %733 = vmatpush1.bf16.msra.mxu0 %v714
    %734 = vmatprep.subr.bf16.mxu0 0
    %735 = vmatpush1.bf16.msra.mxu0 %v715
    %736 = vmatprep.subr.bf16.mxu0 0
    %737 = vmatpush1.bf16.msra.mxu0 %v716
    %738 = vmatprep.subr.bf16.mxu0 0
    %739 = vmatpush1.bf16.msra.mxu0 %v717
    %740 = vmatprep.subr.bf16.mxu0 0
    %741 = vmatpush1.bf16.msra.mxu0 %v718
    %742 = vmatprep.subr.bf16.mxu0 0
    %743 = vmatpush1.bf16.msra.mxu0 %v719
    %744 = vmatprep.subr.bf16.mxu0 0
    %745 = vmatpush1.bf16.msra.mxu0 0
    %746 = vmatprep.subr.bf16.mxu0 0
    %747 = vmatpush1.bf16.msra.mxu0 0
    %748 = vmatprep.subr.bf16.mxu0 0
    %749 = vmatpush1.bf16.msra.mxu0 0
    %750 = vmatprep.subr.bf16.mxu0 0
    %751 = vmatpush1.bf16.msra.mxu0 0
    %752 = vmatprep.subr.bf16.mxu0 0
    %753 = vmatpush1.bf16.msra.mxu0 0
    %754 = vmatprep.subr.bf16.mxu0 0
    %755 = vmatpush1.bf16.msra.mxu0 0
    %756 = vmatprep.subr.bf16.mxu0 0
    %757 = vmatpush1.bf16.msra.mxu0 0
    %758 = vmatprep.subr.bf16.mxu0 0
    %759 = vmatpush1.bf16.msra.mxu0 0
    %760 = vmatprep.mubr.bf16.mxu0 0
    %761 = vmatmul.mubr.bf16.gmra.mrb[0].mxu0 %v656
    %v762 = vpop.f32.mrb[0].mxu0
    %v763 = vadd.f32 %v678, %v762
    %v764 = vpop.f32.mrb[0].mxu0
    %v765 = vpop.f32.mrb[0].mxu0
    %v766 = vpop.f32.mrb[0].mxu0
    %767 = vdwg.mxu0
    %v768 = vmax.f32 %v763, 0.0
    %v769 = vpack.c.bf16 %v768, %v768
    %v770 = vld [vmem:[%s5] sm:$0xf]
    %v771 = vld [vmem:[%s5 + $0x4] sm:$0xf]
    %v772 = vld [vmem:[%s5 + $0x8] sm:$0xf]
    %v773 = vld [vmem:[%s5 + $0xc] sm:$0xf]
    %v774 = vld [vmem:[%s5 + $0x10] sm:$0xf]
    %v775 = vld [vmem:[%s5 + $0x14] sm:$0xf]
    %v776 = vld [vmem:[%s5 + $0x18] sm:$0xf]
    %v777 = vld [vmem:[%s5 + $0x1c] sm:$0xf]
    %v778 = vld [vmem:[%s5 + $0x20] sm:$0xf]
    %v779 = vld [vmem:[%s5 + $0x24] sm:$0xf]
    %v780 = vld [vmem:[%s5 + $0x28] sm:$0xf]
    %v781 = vld [vmem:[%s5 + $0x2c] sm:$0xf]
    %v782 = vld [vmem:[%s5 + $0x30] sm:$0xf]
    %v783 = vld [vmem:[%s5 + $0x34] sm:$0xf]
    %v784 = vld [vmem:[%s5 + $0x38] sm:$0xf]
    %v785 = vld [vmem:[%s5 + $0x3c] sm:$0xf]
    %v786 = vld [vmem:[%s6] sm:$0x1]
    %v788 = vlaneseq
    %v789 = vshrl.u32 %v788, 7
    %v790 = vsub.s32 0, %v789
    %v791 = vrot.slane %v786, %v790
    %v809 = vunpack.c.l.b16 %v770
    %v810 = vunpack.c.l.b16 %v771
    %v811 = vunpack.c.l.b16 %v772
    %v812 = vunpack.c.l.b16 %v773
    %v813 = vunpack.c.l.b16 %v774
    %v814 = vunpack.c.l.b16 %v775
    %v815 = vunpack.c.l.b16 %v776
    %v816 = vunpack.c.l.b16 %v777
    %v817 = vunpack.c.l.b16 %v778
    %v818 = vunpack.c.l.b16 %v779
    %v819 = vunpack.c.l.b16 %v780
    %v820 = vunpack.c.l.b16 %v781
    %v821 = vunpack.c.l.b16 %v782
    %v822 = vunpack.c.l.b16 %v783
    %v823 = vunpack.c.l.b16 %v784
    %v824 = vunpack.c.l.b16 %v785
    %v825 = vpack.c.b16 %v810, %v809
    %v826 = vpack.c.b16 %v812, %v811
    %v827 = vpack.c.b16 %v814, %v813
    %v828 = vpack.c.b16 %v816, %v815
    %v829 = vpack.c.b16 %v818, %v817
    %v830 = vpack.c.b16 %v820, %v819
    %v831 = vpack.c.b16 %v822, %v821
    %v832 = vpack.c.b16 %v824, %v823
    %841 = vmatprep.subr.bf16.mxu0 0
    %842 = vmatpush1.bf16.msra.mxu0 %v825
    %843 = vmatprep.subr.bf16.mxu0 0
    %844 = vmatpush1.bf16.msra.mxu0 %v826
    %845 = vmatprep.subr.bf16.mxu0 0
    %846 = vmatpush1.bf16.msra.mxu0 %v827
    %847 = vmatprep.subr.bf16.mxu0 0
    %848 = vmatpush1.bf16.msra.mxu0 %v828
    %849 = vmatprep.subr.bf16.mxu0 0
    %850 = vmatpush1.bf16.msra.mxu0 %v829
    %851 = vmatprep.subr.bf16.mxu0 0
    %852 = vmatpush1.bf16.msra.mxu0 %v830
    %853 = vmatprep.subr.bf16.mxu0 0
    %854 = vmatpush1.bf16.msra.mxu0 %v831
    %855 = vmatprep.subr.bf16.mxu0 0
    %856 = vmatpush1.bf16.msra.mxu0 %v832
    %857 = vmatprep.subr.bf16.mxu0 0
    %858 = vmatpush1.bf16.msra.mxu0 0
    %859 = vmatprep.subr.bf16.mxu0 0
    %860 = vmatpush1.bf16.msra.mxu0 0
    %861 = vmatprep.subr.bf16.mxu0 0
    %862 = vmatpush1.bf16.msra.mxu0 0
    %863 = vmatprep.subr.bf16.mxu0 0
    %864 = vmatpush1.bf16.msra.mxu0 0
    %865 = vmatprep.subr.bf16.mxu0 0
    %866 = vmatpush1.bf16.msra.mxu0 0
    %867 = vmatprep.subr.bf16.mxu0 0
    %868 = vmatpush1.bf16.msra.mxu0 0
    %869 = vmatprep.subr.bf16.mxu0 0
    %870 = vmatpush1.bf16.msra.mxu0 0
    %871 = vmatprep.subr.bf16.mxu0 0
    %872 = vmatpush1.bf16.msra.mxu0 0
    %873 = vmatprep.mubr.bf16.mxu0 0
    %874 = vmatmul.mubr.bf16.gmra.mrb[0].mxu0 %v769
    %v875 = vpop.f32.mrb[0].mxu0
    %v876 = vadd.f32 %v791, %v875
    %v877 = vpop.f32.mrb[0].mxu0
    %v878 = vpop.f32.mrb[0].mxu0
    %v879 = vpop.f32.mrb[0].mxu0
    %880 = vdwg.mxu0
    %vm881 = vcmask 1041408
    %v882 = vsel %vm881, %v876, -inf
    %883 = vmax.xlane.f32.xlu0 %v882
    %v884 = vpop.xlane.xlu0 %883
    %v885 = vsub.f32 %v876, %v884
    %v886 = vmul.f32 %v885, 1.442695
    %v887 = vpow.pop %v886
    %v888 = vsel %vm881, %v887, 0.0
    %889 = vadd.xlane.f32.xlu0 %v888
    %v890 = vpop.xlane.xlu0 %889
    %v891 = vrcp.pop %v890
    %v892 = vmul.f32 %v887, %v891
    %v893 = vpack.c.bf16 %v892, %v892
    %894 = vst [vmem:[%s7] sm:$0x1] %v893
    // Predicated region
    $region34: #{_lambda_.1} parent=1 // pred_check
      _
    $region35: #{_lambda_.1} parent=1 // pred_check_branch
      %896 = sbr.rel (0) target = $region37
    $region36: #{_lambda_.1} parent=1 // pred_region
      _
    $region37: #{_lambda_.1} parent=1 // pred_fallthru
      _
    // Predicated region
    $region38: #{_lambda_.1} parent=1 // pred_check
      _
    $region39: #{_lambda_.1} parent=1 // pred_check_branch
      %898 = sbr.rel (0) target = $region41
    $region40: #{_lambda_.1} parent=1 // pred_region
      _
    $region41: #{_lambda_.1} parent=1 // pred_fallthru
      _
    %899 = vsyncpa [#allocation3], 1

</llo_original>
